<compile_context>
chip_gen: v7x
topology: tpu7x:2x2x1
jax: 0.10.0
libtpu: 0.0.40
codegen_flags: <defaults>
</compile_context>

<pallas_src>
import jax
import jax.numpy as jnp
from jax.experimental import pallas as pl
from jax.experimental.pallas import tpu as pltpu


def _round_up(n, m):
    return ((n + m - 1) // m) * m


# ---------------------------------------------------------------------------
# Kernel
# ---------------------------------------------------------------------------
def mlp_softmax_kernel(x_ref,
                       w0_ref, b0_ref,
                       w1_ref, b1_ref,
                       w2_ref, b2_ref,
                       w3_ref, b3_ref,
                       o_ref):
    # MXU dots take bf16 operands with f32 accumulation; bias add / ReLU /
    # softmax stay in f32 (v5e VPU/EUP have no bf16 support).
    x = x_ref[...].astype(jnp.bfloat16)

    h = jnp.dot(x, w0_ref[...], preferred_element_type=jnp.float32) + b0_ref[...]
    h = jnp.maximum(h, 0.0)

    h = jnp.dot(h.astype(jnp.bfloat16), w1_ref[...],
                preferred_element_type=jnp.float32) + b1_ref[...]
    h = jnp.maximum(h, 0.0)

    h = jnp.dot(h.astype(jnp.bfloat16), w2_ref[...],
                preferred_element_type=jnp.float32) + b2_ref[...]
    h = jnp.maximum(h, 0.0)

    logits = jnp.dot(h.astype(jnp.bfloat16), w3_ref[...],
                     preferred_element_type=jnp.float32) + b3_ref[...]

    # Softmax over the (unpadded, lane-minor) output dim.  Exact divide so
    # rows sum to 1 to f32 precision.
    m = jnp.max(logits, axis=-1, keepdims=True)
    e = jnp.exp(logits - m)
    denom = jnp.sum(e, axis=-1, keepdims=True)
    o_ref[...] = (e / denom).astype(o_ref.dtype)


# ---------------------------------------------------------------------------
# Parameter preparation (one-time, offline)
# ---------------------------------------------------------------------------
def prepare_params(params, n_data):
    """Pad to MXU/lane-friendly shapes and cast matmul weights to bf16.

    Pad lanes/rows get zero weights and zero biases, so relu(0) = 0 and
    padded activation lanes contribute nothing downstream; the math is
    exactly unchanged.  Biases stay f32 (added after f32 accumulation).
    """
    def pad_to(a, shape):
        return jnp.pad(a, [(0, s - d) for s, d in zip(shape, a.shape)])

    k0 = _round_up(n_data, 8)                        # 4   -> 8
    h0 = _round_up(params["w0"].shape[1], 64)        # 50  -> 64
    h1 = _round_up(params["w1"].shape[1], 64)        # 100 -> 128
    h2 = _round_up(params["w2"].shape[1], 64)        # 50  -> 64
    n_out = params["w3"].shape[1]                    # 2**n_data, unpadded

    return dict(
        w0=pad_to(params["w0"], (k0, h0)).astype(jnp.bfloat16),
        b0=pad_to(params["b0"], (1, h0)),
        w1=pad_to(params["w1"], (h0, h1)).astype(jnp.bfloat16),
        b1=pad_to(params["b1"], (1, h1)),
        w2=pad_to(params["w2"], (h1, h2)).astype(jnp.bfloat16),
        b2=pad_to(params["b2"], (1, h2)),
        w3=pad_to(params["w3"], (h2, n_out)).astype(jnp.bfloat16),
        b3=params["b3"],
    )


def _choose_tile_b(B, tile_b):
    """Batch-tile selection (sweep parameter).

    Large tiles amortize the ~0.35us/grid-step fixed overhead; for large B
    the tile is capped so the grid has >= 2 'parallel' steps and v7x can
    shard the batch axis across both TensorCores.
    """
    b8 = _round_up(B, 8)
    if tile_b is None:
        tile_b = 2048      # ~1024 is a better starting point on v5e (1 vst slot)
    tile_b = max(8, _round_up(tile_b, 8))
    if b8 >= 32 and tile_b * 2 > b8:
        tile_b = _round_up(pl.cdiv(b8, 2), 8)
    return min(tile_b, b8)


# ---------------------------------------------------------------------------
# Forward wrapper
# ---------------------------------------------------------------------------
def qgraph_classic_16_softmax_forward(x, prep, *, tile_b=None):
    """x: [B, n_data] float32.  prep: output of prepare_params."""
    B = x.shape[0]
    k0 = prep["w0"].shape[0]
    n_out = prep["w3"].shape[1]

    # Zero-pad the feature dim (n_data -> k0) so layer 0 is a clean MXU pass.
    if x.shape[1] != k0:
        x = jnp.pad(x, ((0, 0), (0, k0 - x.shape[1])))

    # Batch tiling (zero-pad rows; padded rows compute garbage-free softmax
    # on zero inputs and are sliced away below).
    tile_b = _choose_tile_b(B, tile_b)
    b_pad = _round_up(B, tile_b)
    if b_pad != B:
        x = jnp.pad(x, ((0, b_pad - B), (0, 0)))
    grid = (b_pad // tile_b,)

    args = (x,
            prep["w0"], prep["b0"],
            prep["w1"], prep["b1"],
            prep["w2"], prep["b2"],
            prep["w3"], prep["b3"])

    in_specs = [pl.BlockSpec((tile_b, k0), lambda i: (i, 0))]
    # Weights/biases: full-array blocks, constant index_map -> VMEM-resident
    # across the whole batch grid.
    for a in args[1:]:
        in_specs.append(pl.BlockSpec(a.shape, lambda i: (0, 0)))

    # Unpadded, lane-minor output: 8x less writeback than a 128-lane pad.
    out_spec = pl.BlockSpec((tile_b, n_out), lambda i: (i, 0))

    # Cost hint for XLA's scheduler.
    dims = [(prep["w0"].shape[0], prep["w0"].shape[1]),
            (prep["w1"].shape[0], prep["w1"].shape[1]),
            (prep["w2"].shape[0], prep["w2"].shape[1]),
            (prep["w3"].shape[0], n_out)]
    per_row_flops = sum(2 * a * b for a, b in dims)
    weight_bytes = sum(int(a.size) * a.dtype.itemsize for a in args[1:])
    cost = pl.CostEstimate(
        flops=b_pad * per_row_flops,
        transcendentals=b_pad * n_out,
        bytes_accessed=int(x.size) * x.dtype.itemsize
        + b_pad * n_out * 4 + weight_bytes,
    )

    out = pl.pallas_call(
        mlp_softmax_kernel,
        out_shape=jax.ShapeDtypeStruct((b_pad, n_out), jnp.float32),
        grid=grid,
        in_specs=in_specs,
        out_specs=out_spec,
        compiler_params=pltpu.CompilerParams(
            dimension_semantics=("parallel",)),
        cost_estimate=cost,
    )(*args)

    return out[:B] if b_pad != B else out


# ---------------------------------------------------------------------------
# Parameter init + references
# ---------------------------------------------------------------------------
def init_params(key, n_data):
    """Deterministic synthetic init (PyTorch-style uniform bounds)."""
    dims = [(n_data, 50), (50, 100), (100, 50), (50, 2 ** n_data)]
    params = {}
    for i, (fan_in, fan_out) in enumerate(dims):
        key, kw, kb = jax.random.split(key, 3)
        bound = 1.0 / jnp.sqrt(jnp.float32(fan_in))
        params[f"w{i}"] = jax.random.uniform(
            kw, (fan_in, fan_out), jnp.float32, -bound, bound)
        # biases kept 2D [1, out] so they broadcast cleanly on the lane axis
        params[f"b{i}"] = jax.random.uniform(
            kb, (1, fan_out), jnp.float32, -bound, bound)
    return params


def reference_forward_f32(x, params):
    h = x
    for i in range(3):
        h = jnp.maximum(h @ params[f"w{i}"] + params[f"b{i}"], 0.0)
    logits = h @ params["w3"] + params["b3"]
    return jax.nn.softmax(logits, axis=1)


def reference_forward_bf16(x, params):
    """Same numerics as the kernel: bf16 MXU operands, f32 accumulation."""
    def dot(a, w):
        return jnp.dot(a.astype(jnp.bfloat16), w.astype(jnp.bfloat16),
                       preferred_element_type=jnp.float32)
    h = x
    for i in range(3):
        h = jnp.maximum(dot(h, params[f"w{i}"]) + params[f"b{i}"], 0.0)
    logits = dot(h, params["w3"]) + params["b3"]
    return jax.nn.softmax(logits, axis=1)


# TODO(synk): the quantum qlayer built in qgraph_model.__init__ is never used
# by this subclass's layers()/forward, so it is intentionally not translated.

if __name__ == "__main__":
    n_data = 4           # -> output dim 2**4 = 16 (the "16" in the class name)
    batch = 8

    key = jax.random.PRNGKey(0)
    key, kx = jax.random.split(key)
    x = jax.random.normal(kx, (batch, n_data), dtype=jnp.float32)
    params = init_params(key, n_data)
    prep = prepare_params(params, n_data)   # one-time pad + bf16 cast

    out = jax.block_until_ready(qgraph_classic_16_softmax_forward(x, prep))
    assert out.shape == (batch, 2 ** n_data)
    # Exact divide in the kernel -> rows sum to 1 to f32 precision.
    assert jnp.allclose(jnp.sum(out, axis=1), 1.0, atol=1e-4)
    # Tight check vs a reference with matching bf16-matmul numerics.
    assert jnp.allclose(out, reference_forward_bf16(x, params),
                        atol=1e-3, rtol=1e-3)
    # Loose sanity check vs the full-f32 reference (bf16 weight rounding).
    assert jnp.allclose(out, reference_forward_f32(x, params), atol=5e-2)

    # Exercise the multi-tile grid + batch-padding path (B not a tile multiple).
    key, kx2 = jax.random.split(key)
    x2 = jax.random.normal(kx2, (13, n_data), dtype=jnp.float32)
    out2 = jax.block_until_ready(
        qgraph_classic_16_softmax_forward(x2, prep, tile_b=8))
    assert out2.shape == (13, 2 ** n_data)
    assert jnp.allclose(jnp.sum(out2, axis=1), 1.0, atol=1e-4)
    assert jnp.allclose(out2, reference_forward_bf16(x2, params),
                        atol=1e-3, rtol=1e-3)

    print("KERNEL_OK")
</pallas_src>

<mosaic_0001>
module attributes {stable_mosaic.version = 11 : i64} {
  func.func @mlp_softmax_kernel(%arg0: i32, %arg1: memref<8x8xf32, #tpu.memory_space<vmem>>, %arg2: memref<8x64xbf16, #tpu.memory_space<vmem>>, %arg3: memref<1x64xf32, #tpu.memory_space<vmem>>, %arg4: memref<64x128xbf16, #tpu.memory_space<vmem>>, %arg5: memref<1x128xf32, #tpu.memory_space<vmem>>, %arg6: memref<128x64xbf16, #tpu.memory_space<vmem>>, %arg7: memref<1x64xf32, #tpu.memory_space<vmem>>, %arg8: memref<64x16xbf16, #tpu.memory_space<vmem>>, %arg9: memref<1x16xf32, #tpu.memory_space<vmem>>, %arg10: memref<8x16xf32, #tpu.memory_space<vmem>>) attributes {dimension_semantics = [#tpu.dimension_semantics<parallel>], iteration_bounds = array<i64: 1>, scalar_prefetch = 0 : i64, scratch_operands = 0 : i64, tpu.core_type = #tpu.core_type<tc>, window_params = [{transform_indices = @transform_0, window_bounds = array<i64: 8, 8>}, {pipeline_mode = #tpu.pipeline_mode<synchronous>, transform_indices = @transform_1, window_bounds = array<i64: 8, 64>}, {pipeline_mode = #tpu.pipeline_mode<synchronous>, transform_indices = @transform_2, window_bounds = array<i64: 1, 64>}, {pipeline_mode = #tpu.pipeline_mode<synchronous>, transform_indices = @transform_3, window_bounds = array<i64: 64, 128>}, {pipeline_mode = #tpu.pipeline_mode<synchronous>, transform_indices = @transform_4, window_bounds = array<i64: 1, 128>}, {pipeline_mode = #tpu.pipeline_mode<synchronous>, transform_indices = @transform_5, window_bounds = array<i64: 128, 64>}, {pipeline_mode = #tpu.pipeline_mode<synchronous>, transform_indices = @transform_6, window_bounds = array<i64: 1, 64>}, {pipeline_mode = #tpu.pipeline_mode<synchronous>, transform_indices = @transform_7, window_bounds = array<i64: 64, 16>}, {pipeline_mode = #tpu.pipeline_mode<synchronous>, transform_indices = @transform_8, window_bounds = array<i64: 1, 16>}, {transform_indices = @transform_9, window_bounds = array<i64: 8, 16>}]} {
    %c0 = arith.constant 0 : index
    %c0_0 = arith.constant 0 : index
    %0 = vector.load %arg1[%c0, %c0_0] : memref<8x8xf32, #tpu.memory_space<vmem>>, vector<8x8xf32>
    %1 = arith.truncf %0 : vector<8x8xf32> to vector<8x8xbf16>
    %c0_1 = arith.constant 0 : index
    %c0_2 = arith.constant 0 : index
    %2 = vector.load %arg2[%c0_1, %c0_2] : memref<8x64xbf16, #tpu.memory_space<vmem>>, vector<8x64xbf16>
    %cst = arith.constant dense<0.000000e+00> : vector<8x64xf32>
    %3 = tpu.matmul %1, %2, %cst {dimension_numbers = #tpu.dot_dimension_numbers<[1], [0], [0], [1], [0, 0, 1, 1], [], []>} : vector<8x8xbf16>, vector<8x64xbf16>, vector<8x64xf32> -> vector<8x64xf32>
    %c0_3 = arith.constant 0 : index
    %c0_4 = arith.constant 0 : index
    %4 = vector.load %arg3[%c0_3, %c0_4] : memref<1x64xf32, #tpu.memory_space<vmem>>, vector<1x64xf32>
    %5 = vector.broadcast %4 : vector<1x64xf32> to vector<8x64xf32>
    %6 = arith.addf %3, %5 : vector<8x64xf32>
    %cst_5 = arith.constant 0.000000e+00 : f32
    %7 = vector.broadcast %cst_5 : f32 to vector<8x64xf32>
    %8 = arith.maximumf %6, %7 : vector<8x64xf32>
    %9 = arith.truncf %8 : vector<8x64xf32> to vector<8x64xbf16>
    %c0_6 = arith.constant 0 : index
    %c0_7 = arith.constant 0 : index
    %10 = vector.load %arg4[%c0_6, %c0_7] : memref<64x128xbf16, #tpu.memory_space<vmem>>, vector<64x128xbf16>
    %cst_8 = arith.constant dense<0.000000e+00> : vector<8x128xf32>
    %11 = tpu.matmul %9, %10, %cst_8 {dimension_numbers = #tpu.dot_dimension_numbers<[1], [0], [0], [1], [0, 0, 1, 1], [], []>} : vector<8x64xbf16>, vector<64x128xbf16>, vector<8x128xf32> -> vector<8x128xf32>
    %c0_9 = arith.constant 0 : index
    %c0_10 = arith.constant 0 : index
    %12 = vector.load %arg5[%c0_9, %c0_10] : memref<1x128xf32, #tpu.memory_space<vmem>>, vector<1x128xf32>
    %13 = vector.broadcast %12 : vector<1x128xf32> to vector<8x128xf32>
    %14 = arith.addf %11, %13 : vector<8x128xf32>
    %cst_11 = arith.constant 0.000000e+00 : f32
    %15 = vector.broadcast %cst_11 : f32 to vector<8x128xf32>
    %16 = arith.maximumf %14, %15 : vector<8x128xf32>
    %17 = arith.truncf %16 : vector<8x128xf32> to vector<8x128xbf16>
    %c0_12 = arith.constant 0 : index
    %c0_13 = arith.constant 0 : index
    %18 = vector.load %arg6[%c0_12, %c0_13] : memref<128x64xbf16, #tpu.memory_space<vmem>>, vector<128x64xbf16>
    %cst_14 = arith.constant dense<0.000000e+00> : vector<8x64xf32>
    %19 = tpu.matmul %17, %18, %cst_14 {dimension_numbers = #tpu.dot_dimension_numbers<[1], [0], [0], [1], [0, 0, 1, 1], [], []>} : vector<8x128xbf16>, vector<128x64xbf16>, vector<8x64xf32> -> vector<8x64xf32>
    %c0_15 = arith.constant 0 : index
    %c0_16 = arith.constant 0 : index
    %20 = vector.load %arg7[%c0_15, %c0_16] : memref<1x64xf32, #tpu.memory_space<vmem>>, vector<1x64xf32>
    %21 = vector.broadcast %20 : vector<1x64xf32> to vector<8x64xf32>
    %22 = arith.addf %19, %21 : vector<8x64xf32>
    %cst_17 = arith.constant 0.000000e+00 : f32
    %23 = vector.broadcast %cst_17 : f32 to vector<8x64xf32>
    %24 = arith.maximumf %22, %23 : vector<8x64xf32>
    %25 = arith.truncf %24 : vector<8x64xf32> to vector<8x64xbf16>
    %c0_18 = arith.constant 0 : index
    %c0_19 = arith.constant 0 : index
    %26 = vector.load %arg8[%c0_18, %c0_19] : memref<64x16xbf16, #tpu.memory_space<vmem>>, vector<64x16xbf16>
    %cst_20 = arith.constant dense<0.000000e+00> : vector<8x16xf32>
    %27 = tpu.matmul %25, %26, %cst_20 {dimension_numbers = #tpu.dot_dimension_numbers<[1], [0], [0], [1], [0, 0, 1, 1], [], []>} : vector<8x64xbf16>, vector<64x16xbf16>, vector<8x16xf32> -> vector<8x16xf32>
    %c0_21 = arith.constant 0 : index
    %c0_22 = arith.constant 0 : index
    %28 = vector.load %arg9[%c0_21, %c0_22] : memref<1x16xf32, #tpu.memory_space<vmem>>, vector<1x16xf32>
    %29 = vector.broadcast %28 : vector<1x16xf32> to vector<8x16xf32>
    %30 = arith.addf %27, %29 : vector<8x16xf32>
    %cst_23 = arith.constant dense<0xFF800000> : vector<8xf32>
    %31 = vector.multi_reduction <maximumf>, %30, %cst_23 [1] : vector<8x16xf32> to vector<8xf32>
    %32 = vector.shape_cast %31 : vector<8xf32> to vector<8x1xf32>
    %33 = vector.broadcast %32 : vector<8x1xf32> to vector<8x16xf32>
    %34 = arith.subf %30, %33 : vector<8x16xf32>
    %35 = math.exp %34 : vector<8x16xf32>
    %cst_24 = arith.constant dense<0.000000e+00> : vector<8xf32>
    %36 = vector.multi_reduction <add>, %35, %cst_24 [1] : vector<8x16xf32> to vector<8xf32>
    %37 = vector.shape_cast %36 : vector<8xf32> to vector<8x1xf32>
    %38 = vector.broadcast %37 : vector<8x1xf32> to vector<8x16xf32>
    %39 = arith.divf %35, %38 : vector<8x16xf32>
    %c0_25 = arith.constant 0 : index
    %c0_26 = arith.constant 0 : index
    %40 = vector.load %arg10[%c0_25, %c0_26] : memref<8x16xf32, #tpu.memory_space<vmem>>, vector<8x16xf32>
    tpu.vector_store %arg10[%c0_25, %c0_26], %39 {strides = array<i32>} : memref<8x16xf32, #tpu.memory_space<vmem>>, vector<8x16xf32>,
    return
  }
  func.func @transform_0(%arg0: i32) -> (i32, i32) {
    %c0_i32 = arith.constant 0 : i32
    %c0_i32_0 = arith.constant 0 : i32
    return %arg0, %c0_i32 : i32, i32
  }
  func.func @transform_1(%arg0: i32) -> (i32, i32) {
    %c0_i32 = arith.constant 0 : i32
    %c0_i32_0 = arith.constant 0 : i32
    %c0_i32_1 = arith.constant 0 : i32
    return %c0_i32, %c0_i32_0 : i32, i32
  }
  func.func @transform_2(%arg0: i32) -> (i32, i32) {
    %c0_i32 = arith.constant 0 : i32
    %c0_i32_0 = arith.constant 0 : i32
    %c0_i32_1 = arith.constant 0 : i32
    return %c0_i32, %c0_i32_0 : i32, i32
  }
  func.func @transform_3(%arg0: i32) -> (i32, i32) {
    %c0_i32 = arith.constant 0 : i32
    %c0_i32_0 = arith.constant 0 : i32
    %c0_i32_1 = arith.constant 0 : i32
    return %c0_i32, %c0_i32_0 : i32, i32
  }
  func.func @transform_4(%arg0: i32) -> (i32, i32) {
    %c0_i32 = arith.constant 0 : i32
    %c0_i32_0 = arith.constant 0 : i32
    %c0_i32_1 = arith.constant 0 : i32
    return %c0_i32, %c0_i32_0 : i32, i32
  }
  func.func @transform_5(%arg0: i32) -> (i32, i32) {
    %c0_i32 = arith.constant 0 : i32
    %c0_i32_0 = arith.constant 0 : i32
    %c0_i32_1 = arith.constant 0 : i32
    return %c0_i32, %c0_i32_0 : i32, i32
  }
  func.func @transform_6(%arg0: i32) -> (i32, i32) {
    %c0_i32 = arith.constant 0 : i32
    %c0_i32_0 = arith.constant 0 : i32
    %c0_i32_1 = arith.constant 0 : i32
    return %c0_i32, %c0_i32_0 : i32, i32
  }
  func.func @transform_7(%arg0: i32) -> (i32, i32) {
    %c0_i32 = arith.constant 0 : i32
    %c0_i32_0 = arith.constant 0 : i32
    %c0_i32_1 = arith.constant 0 : i32
    return %c0_i32, %c0_i32_0 : i32, i32
  }
  func.func @transform_8(%arg0: i32) -> (i32, i32) {
    %c0_i32 = arith.constant 0 : i32
    %c0_i32_0 = arith.constant 0 : i32
    %c0_i32_1 = arith.constant 0 : i32
    return %c0_i32, %c0_i32_0 : i32, i32
  }
  func.func @transform_9(%arg0: i32) -> (i32, i32) {
    %c0_i32 = arith.constant 0 : i32
    %c0_i32_0 = arith.constant 0 : i32
    return %arg0, %c0_i32 : i32, i32
  }
}

</mosaic_0001>

<llo_original>
// kernel: tpu_custom_call.1
$region0: #{tpu_custom_call.1}
  #allocation0 [shape = 'u32[]', space=smem, size = 0x4, offset = 0x4, fixed_abs, tag = 'smem constant byte address 0x4 - core index']
  #allocation1 [shape = 'u32[144,128]{1,0:T(1,128)}', space=vmem, size = 0x12000, scoped, tag = 'internal scratch']
  %s0 = inlined_call_operand.vmem [shape: f32[8,8], index: 0, kind: input, shape index: {}]
  %s1 = inlined_call_operand.vmem [shape: bf16[8,64], index: 1, kind: input, shape index: {}]
  %s2 = inlined_call_operand.vmem [shape: f32[1,64], index: 2, kind: input, shape index: {}]
  %s3 = inlined_call_operand.vmem [shape: bf16[64,128], index: 3, kind: input, shape index: {}]
  %s4 = inlined_call_operand.vmem [shape: f32[1,128], index: 4, kind: input, shape index: {}]
  %s5 = inlined_call_operand.vmem [shape: bf16[128,64], index: 5, kind: input, shape index: {}]
  %s6 = inlined_call_operand.vmem [shape: f32[1,64], index: 6, kind: input, shape index: {}]
  %s7 = inlined_call_operand.vmem [shape: bf16[64,16], index: 7, kind: input, shape index: {}]
  %s8 = inlined_call_operand.vmem [shape: f32[1,16], index: 8, kind: input, shape index: {}]
  %s9 = inlined_call_operand.hbm [shape: f32[8,16], index: 9, kind: output, shape index: {}]
  %s10 = sld [smem:[#allocation0]]
  $region46: #{tpu_custom_call.1} parent=0
    _
  %s12 = ssub.s32 1, %s10
  %s13 = scalar_select 0, %s12, %s10
  $region1: #{tpu_custom_call.1} parent=0
    #allocation2 [shape = 'u8[4096]{0}', space=vmem, size = 0x1000, scoped, tag = 'output window, operand 0, single buffered']
    #allocation3 [shape = 's32[1]{0}', space=sflag, size = 0x4, scoped, tag = 'scoped memory for tpu_custom_call.1']
    %14 = vsyncpa [#allocation3], 0
    // Predicated region
    $region2: #{tpu_custom_call.1} parent=1 // pred_check
      _
    $region3: #{tpu_custom_call.1} parent=1 // pred_check_branch
      %16 = sbr.rel (0) target = $region5
    $region4: #{tpu_custom_call.1} parent=1 // pred_region
      _
    $region5: #{tpu_custom_call.1} parent=1 // pred_fallthru
      _
    // Predicated region
    $region6: #{tpu_custom_call.1} parent=1 // pred_check
      _
    $region7: #{tpu_custom_call.1} parent=1 // pred_check_branch
      %18 = sbr.rel (0) target = $region9
    $region8: #{tpu_custom_call.1} parent=1 // pred_region
      _
    $region9: #{tpu_custom_call.1} parent=1 // pred_fallthru
      _
    // Predicated region
    $region10: #{tpu_custom_call.1} parent=1 // pred_check
      _
    $region11: #{tpu_custom_call.1} parent=1 // pred_check_branch
      %20 = sbr.rel (0) target = $region13
    $region12: #{tpu_custom_call.1} parent=1 // pred_region
      _
    $region13: #{tpu_custom_call.1} parent=1 // pred_fallthru
      _
    // Predicated region
    $region14: #{tpu_custom_call.1} parent=1 // pred_check
      _
    $region15: #{tpu_custom_call.1} parent=1 // pred_check_branch
      %22 = sbr.rel (0) target = $region17
    $region16: #{tpu_custom_call.1} parent=1 // pred_region
      _
    $region17: #{tpu_custom_call.1} parent=1 // pred_fallthru
      _
    // Predicated region
    $region18: #{tpu_custom_call.1} parent=1 // pred_check
      _
    $region19: #{tpu_custom_call.1} parent=1 // pred_check_branch
      %24 = sbr.rel (0) target = $region21
    $region20: #{tpu_custom_call.1} parent=1 // pred_region
      _
    $region21: #{tpu_custom_call.1} parent=1 // pred_fallthru
      _
    // Predicated region
    $region22: #{tpu_custom_call.1} parent=1 // pred_check
      _
    $region23: #{tpu_custom_call.1} parent=1 // pred_check_branch
      %26 = sbr.rel (0) target = $region25
    $region24: #{tpu_custom_call.1} parent=1 // pred_region
      _
    $region25: #{tpu_custom_call.1} parent=1 // pred_fallthru
      _
    // Predicated region
    $region26: #{tpu_custom_call.1} parent=1 // pred_check
      _
    $region27: #{tpu_custom_call.1} parent=1 // pred_check_branch
      %28 = sbr.rel (0) target = $region29
    $region28: #{tpu_custom_call.1} parent=1 // pred_region
      _
    $region29: #{tpu_custom_call.1} parent=1 // pred_fallthru
      _
    // Predicated region
    $region30: #{tpu_custom_call.1} parent=1 // pred_check
      _
    $region31: #{tpu_custom_call.1} parent=1 // pred_check_branch
      %30 = sbr.rel (0) target = $region33
    $region32: #{tpu_custom_call.1} parent=1 // pred_region
      _
    $region33: #{tpu_custom_call.1} parent=1 // pred_fallthru
      _
    // Predicated region
    $region34: #{tpu_custom_call.1} parent=1 // pred_check
      _
    $region35: #{tpu_custom_call.1} parent=1 // pred_check_branch
      %32 = sbr.rel (0) target = $region37
    $region36: #{tpu_custom_call.1} parent=1 // pred_region
      _
    $region37: #{tpu_custom_call.1} parent=1 // pred_fallthru
      _
    %v34 = vld [vmem:[%s0] sm:$0xff]
    %v35 = vpack.c.bf16 %v34, %v34
    %v36 = vld [vmem:[%s1] sm:$0xf]
    %v37 = vld [vmem:[%s2] sm:$0x1]
    %v39 = vlaneseq
    %v40 = vshrl.u32 %v39, 7
    %v41 = vsub.s32 0, %v40
    %v42 = vrot.slane %v37, %v41
    %vm44 = vcmask 64512
    %v46 = vsel %vm44, %v35, 0
    %vm48 = vcmask 1043456
    %v50 = vsel %vm48, %v36, 0
    %52 = vmatprep.subr.bf16.mxu0 0
    %53 = vmatpush1.bf16.msra.mxu0 %v50
    %54 = vmatprep.subr.bf16.mxu0 0
    %55 = vmatpush1.bf16.msra.mxu0 0
    %56 = vmatprep.subr.bf16.mxu0 0
    %57 = vmatpush1.bf16.msra.mxu0 0
    %58 = vmatprep.subr.bf16.mxu0 0
    %59 = vmatpush1.bf16.msra.mxu0 0
    %60 = vmatprep.subr.bf16.mxu0 0
    %61 = vmatpush1.bf16.msra.mxu0 0
    %62 = vmatprep.subr.bf16.mxu0 0
    %63 = vmatpush1.bf16.msra.mxu0 0
    %64 = vmatprep.subr.bf16.mxu0 0
    %65 = vmatpush1.bf16.msra.mxu0 0
    %66 = vmatprep.subr.bf16.mxu0 0
    %67 = vmatpush1.bf16.msra.mxu0 0
    %68 = vmatprep.subr.bf16.mxu0 0
    %69 = vmatpush1.bf16.msra.mxu0 0
    %70 = vmatprep.subr.bf16.mxu0 0
    %71 = vmatpush1.bf16.msra.mxu0 0
    %72 = vmatprep.subr.bf16.mxu0 0
    %73 = vmatpush1.bf16.msra.mxu0 0
    %74 = vmatprep.subr.bf16.mxu0 0
    %75 = vmatpush1.bf16.msra.mxu0 0
    %76 = vmatprep.subr.bf16.mxu0 0
    %77 = vmatpush1.bf16.msra.mxu0 0
    %78 = vmatprep.subr.bf16.mxu0 0
    %79 = vmatpush1.bf16.msra.mxu0 0
    %80 = vmatprep.subr.bf16.mxu0 0
    %81 = vmatpush1.bf16.msra.mxu0 0
    %82 = vmatprep.subr.bf16.mxu0 0
    %83 = vmatpush1.bf16.msra.mxu0 0
    %84 = vmatprep.mubr.bf16.mxu0 0
    %85 = vmatmul.mubr.bf16.gmra.mrb[0].mxu0 %v46
    %v86 = vpop.f32.mrb[0].mxu0
    %v87 = vadd.f32 %v42, %v86
    %v88 = vpop.f32.mrb[0].mxu0
    %v89 = vpop.f32.mrb[0].mxu0
    %v90 = vpop.f32.mrb[0].mxu0
    %91 = vdwg.mxu0
    %v92 = vmax.f32 %v87, 0.0
    %v93 = vpack.c.bf16 %v92, %v92
    %v94 = vld [vmem:[%s3] sm:$0xf]
    %v95 = vld [vmem:[%s3 + $0x4] sm:$0xf]
    %v96 = vld [vmem:[%s3 + $0x8] sm:$0xf]
    %v97 = vld [vmem:[%s3 + $0xc] sm:$0xf]
    %v98 = vld [vmem:[%s3 + $0x10] sm:$0xf]
    %v99 = vld [vmem:[%s3 + $0x14] sm:$0xf]
    %v100 = vld [vmem:[%s3 + $0x18] sm:$0xf]
    %v101 = vld [vmem:[%s3 + $0x1c] sm:$0xf]
    %v102 = vld [vmem:[%s4] sm:$0x1]
    %v104 = vlaneseq
    %v105 = vshrl.u32 %v104, 7
    %v106 = vsub.s32 0, %v105
    %v107 = vrot.slane %v102, %v106
    %v117 = vunpack.c.l.b16 %v94
    %v118 = vunpack.c.l.b16 %v95
    %v119 = vunpack.c.l.b16 %v96
    %v120 = vunpack.c.l.b16 %v97
    %v121 = vunpack.c.l.b16 %v98
    %v122 = vunpack.c.l.b16 %v99
    %v123 = vunpack.c.l.b16 %v100
    %v124 = vunpack.c.l.b16 %v101
    %v125 = vpack.c.b16 %v118, %v117
    %v126 = vpack.c.b16 %v120, %v119
    %v127 = vpack.c.b16 %v122, %v121
    %v128 = vpack.c.b16 %v124, %v123
    %vm133 = vcmask 523264
    %v135 = vsel %vm133, %v93, 0
    %137 = vmatprep.subr.bf16.mxu0 0
    %138 = vmatpush1.bf16.msra.mxu0 %v125
    %139 = vmatprep.subr.bf16.mxu0 0
    %140 = vmatpush1.bf16.msra.mxu0 %v126
    %141 = vmatprep.subr.bf16.mxu0 0
    %142 = vmatpush1.bf16.msra.mxu0 %v127
    %143 = vmatprep.subr.bf16.mxu0 0
    %144 = vmatpush1.bf16.msra.mxu0 %v128
    %145 = vmatprep.subr.bf16.mxu0 0
    %146 = vmatpush1.bf16.msra.mxu0 0
    %147 = vmatprep.subr.bf16.mxu0 0
    %148 = vmatpush1.bf16.msra.mxu0 0
    %149 = vmatprep.subr.bf16.mxu0 0
    %150 = vmatpush1.bf16.msra.mxu0 0
    %151 = vmatprep.subr.bf16.mxu0 0
    %152 = vmatpush1.bf16.msra.mxu0 0
    %153 = vmatprep.subr.bf16.mxu0 0
    %154 = vmatpush1.bf16.msra.mxu0 0
    %155 = vmatprep.subr.bf16.mxu0 0
    %156 = vmatpush1.bf16.msra.mxu0 0
    %157 = vmatprep.subr.bf16.mxu0 0
    %158 = vmatpush1.bf16.msra.mxu0 0
    %159 = vmatprep.subr.bf16.mxu0 0
    %160 = vmatpush1.bf16.msra.mxu0 0
    %161 = vmatprep.subr.bf16.mxu0 0
    %162 = vmatpush1.bf16.msra.mxu0 0
    %163 = vmatprep.subr.bf16.mxu0 0
    %164 = vmatpush1.bf16.msra.mxu0 0
    %165 = vmatprep.subr.bf16.mxu0 0
    %166 = vmatpush1.bf16.msra.mxu0 0
    %167 = vmatprep.subr.bf16.mxu0 0
    %168 = vmatpush1.bf16.msra.mxu0 0
    %169 = vmatprep.mubr.bf16.mxu0 0
    %170 = vmatmul.mubr.bf16.gmra.mrb[0].mxu0 %v135
    %v171 = vpop.f32.mrb[0].mxu0
    %v172 = vadd.f32 %v107, %v171
    %v173 = vpop.f32.mrb[0].mxu0
    %v174 = vpop.f32.mrb[0].mxu0
    %v175 = vpop.f32.mrb[0].mxu0
    %176 = vdwg.mxu0
    %v177 = vmax.f32 %v172, 0.0
    %v178 = vpack.c.bf16 %v177, %v177
    %v179 = vld [vmem:[%s5] sm:$0xf]
    %v180 = vld [vmem:[%s5 + $0x4] sm:$0xf]
    %v181 = vld [vmem:[%s5 + $0x8] sm:$0xf]
    %v182 = vld [vmem:[%s5 + $0xc] sm:$0xf]
    %v183 = vld [vmem:[%s5 + $0x10] sm:$0xf]
    %v184 = vld [vmem:[%s5 + $0x14] sm:$0xf]
    %v185 = vld [vmem:[%s5 + $0x18] sm:$0xf]
    %v186 = vld [vmem:[%s5 + $0x1c] sm:$0xf]
    %v187 = vld [vmem:[%s5 + $0x20] sm:$0xf]
    %v188 = vld [vmem:[%s5 + $0x24] sm:$0xf]
    %v189 = vld [vmem:[%s5 + $0x28] sm:$0xf]
    %v190 = vld [vmem:[%s5 + $0x2c] sm:$0xf]
    %v191 = vld [vmem:[%s5 + $0x30] sm:$0xf]
    %v192 = vld [vmem:[%s5 + $0x34] sm:$0xf]
    %v193 = vld [vmem:[%s5 + $0x38] sm:$0xf]
    %v194 = vld [vmem:[%s5 + $0x3c] sm:$0xf]
    %v195 = vld [vmem:[%s6] sm:$0x1]
    %v197 = vlaneseq
    %v198 = vshrl.u32 %v197, 7
    %v199 = vsub.s32 0, %v198
    %v200 = vrot.slane %v195, %v199
    %v218 = vunpack.c.l.b16 %v179
    %v219 = vunpack.c.l.b16 %v180
    %v220 = vunpack.c.l.b16 %v181
    %v221 = vunpack.c.l.b16 %v182
    %v222 = vunpack.c.l.b16 %v183
    %v223 = vunpack.c.l.b16 %v184
    %v224 = vunpack.c.l.b16 %v185
    %v225 = vunpack.c.l.b16 %v186
    %v226 = vunpack.c.l.b16 %v187
    %v227 = vunpack.c.l.b16 %v188
    %v228 = vunpack.c.l.b16 %v189
    %v229 = vunpack.c.l.b16 %v190
    %v230 = vunpack.c.l.b16 %v191
    %v231 = vunpack.c.l.b16 %v192
    %v232 = vunpack.c.l.b16 %v193
    %v233 = vunpack.c.l.b16 %v194
    %v234 = vpack.c.b16 %v219, %v218
    %v235 = vpack.c.b16 %v221, %v220
    %v236 = vpack.c.b16 %v223, %v222
    %v237 = vpack.c.b16 %v225, %v224
    %v238 = vpack.c.b16 %v227, %v226
    %v239 = vpack.c.b16 %v229, %v228
    %v240 = vpack.c.b16 %v231, %v230
    %v241 = vpack.c.b16 %v233, %v232
    %250 = vmatprep.subr.bf16.mxu0 0
    %251 = vmatpush1.bf16.msra.mxu0 %v234
    %252 = vmatprep.subr.bf16.mxu0 0
    %253 = vmatpush1.bf16.msra.mxu0 %v235
    %254 = vmatprep.subr.bf16.mxu0 0
    %255 = vmatpush1.bf16.msra.mxu0 %v236
    %256 = vmatprep.subr.bf16.mxu0 0
    %257 = vmatpush1.bf16.msra.mxu0 %v237
    %258 = vmatprep.subr.bf16.mxu0 0
    %259 = vmatpush1.bf16.msra.mxu0 %v238
    %260 = vmatprep.subr.bf16.mxu0 0
    %261 = vmatpush1.bf16.msra.mxu0 %v239
    %262 = vmatprep.subr.bf16.mxu0 0
    %263 = vmatpush1.bf16.msra.mxu0 %v240
    %264 = vmatprep.subr.bf16.mxu0 0
    %265 = vmatpush1.bf16.msra.mxu0 %v241
    %266 = vmatprep.subr.bf16.mxu0 0
    %267 = vmatpush1.bf16.msra.mxu0 0
    %268 = vmatprep.subr.bf16.mxu0 0
    %269 = vmatpush1.bf16.msra.mxu0 0
    %270 = vmatprep.subr.bf16.mxu0 0
    %271 = vmatpush1.bf16.msra.mxu0 0
    %272 = vmatprep.subr.bf16.mxu0 0
    %273 = vmatpush1.bf16.msra.mxu0 0
    %274 = vmatprep.subr.bf16.mxu0 0
    %275 = vmatpush1.bf16.msra.mxu0 0
    %276 = vmatprep.subr.bf16.mxu0 0
    %277 = vmatpush1.bf16.msra.mxu0 0
    %278 = vmatprep.subr.bf16.mxu0 0
    %279 = vmatpush1.bf16.msra.mxu0 0
    %280 = vmatprep.subr.bf16.mxu0 0
    %281 = vmatpush1.bf16.msra.mxu0 0
    %282 = vmatprep.mubr.bf16.mxu0 0
    %283 = vmatmul.mubr.bf16.gmra.mrb[0].mxu0 %v178
    %v284 = vpop.f32.mrb[0].mxu0
    %v285 = vadd.f32 %v200, %v284
    %v286 = vpop.f32.mrb[0].mxu0
    %v287 = vpop.f32.mrb[0].mxu0
    %v288 = vpop.f32.mrb[0].mxu0
    %289 = vdwg.mxu0
    %v290 = vmax.f32 %v285, 0.0
    %v291 = vpack.c.bf16 %v290, %v290
    %v292 = vld [vmem:[%s7] sm:$0xf]
    %v293 = vld [vmem:[%s7 + $0x4] sm:$0xf]
    %v294 = vld [vmem:[%s7 + $0x8] sm:$0xf]
    %v295 = vld [vmem:[%s7 + $0xc] sm:$0xf]
    %v296 = vld [vmem:[%s7 + $0x10] sm:$0xf]
    %v297 = vld [vmem:[%s7 + $0x14] sm:$0xf]
    %v298 = vld [vmem:[%s7 + $0x18] sm:$0xf]
    %v299 = vld [vmem:[%s7 + $0x1c] sm:$0xf]
    %v300 = vld [vmem:[%s8] sm:$0x1]
    %v302 = vlaneseq
    %v303 = vshrl.u32 %v302, 7
    %v304 = vsub.s32 0, %v303
    %v305 = vrot.slane %v300, %v304
    %v315 = vunpack.c.l.b16 %v292
    %v316 = vunpack.c.l.b16 %v293
    %v317 = vunpack.c.l.b16 %v294
    %v318 = vunpack.c.l.b16 %v295
    %v319 = vunpack.c.l.b16 %v296
    %v320 = vunpack.c.l.b16 %v297
    %v321 = vunpack.c.l.b16 %v298
    %v322 = vunpack.c.l.b16 %v299
    %v323 = vpack.c.b16 %v316, %v315
    %v324 = vpack.c.b16 %v318, %v317
    %v325 = vpack.c.b16 %v320, %v319
    %v326 = vpack.c.b16 %v322, %v321
    %v332 = vsel %vm133, %v291, 0
    %334 = vmatprep.subr.bf16.mxu0 0
    %335 = vmatpush1.bf16.msra.mxu0 %v323
    %336 = vmatprep.subr.bf16.mxu0 0
    %337 = vmatpush1.bf16.msra.mxu0 %v324
    %338 = vmatprep.subr.bf16.mxu0 0
    %339 = vmatpush1.bf16.msra.mxu0 %v325
    %340 = vmatprep.subr.bf16.mxu0 0
    %341 = vmatpush1.bf16.msra.mxu0 %v326
    %342 = vmatprep.subr.bf16.mxu0 0
    %343 = vmatpush1.bf16.msra.mxu0 0
    %344 = vmatprep.subr.bf16.mxu0 0
    %345 = vmatpush1.bf16.msra.mxu0 0
    %346 = vmatprep.subr.bf16.mxu0 0
    %347 = vmatpush1.bf16.msra.mxu0 0
    %348 = vmatprep.subr.bf16.mxu0 0
    %349 = vmatpush1.bf16.msra.mxu0 0
    %350 = vmatprep.subr.bf16.mxu0 0
    %351 = vmatpush1.bf16.msra.mxu0 0
    %352 = vmatprep.subr.bf16.mxu0 0
    %353 = vmatpush1.bf16.msra.mxu0 0
    %354 = vmatprep.subr.bf16.mxu0 0
    %355 = vmatpush1.bf16.msra.mxu0 0
    %356 = vmatprep.subr.bf16.mxu0 0
    %357 = vmatpush1.bf16.msra.mxu0 0
    %358 = vmatprep.subr.bf16.mxu0 0
    %359 = vmatpush1.bf16.msra.mxu0 0
    %360 = vmatprep.subr.bf16.mxu0 0
    %361 = vmatpush1.bf16.msra.mxu0 0
    %362 = vmatprep.subr.bf16.mxu0 0
    %363 = vmatpush1.bf16.msra.mxu0 0
    %364 = vmatprep.subr.bf16.mxu0 0
    %365 = vmatpush1.bf16.msra.mxu0 0
    %366 = vmatprep.mubr.bf16.mxu0 0
    %367 = vmatmul.mubr.bf16.gmra.mrb[0].mxu0 %v332
    %v368 = vpop.f32.mrb[0].mxu0
    %v369 = vadd.f32 %v305, %v368
    %v370 = vpop.f32.mrb[0].mxu0
    %v371 = vpop.f32.mrb[0].mxu0
    %v372 = vpop.f32.mrb[0].mxu0
    %373 = vdwg.mxu0
    %vm374 = vcmask 130048
    %v375 = vsel %vm374, %v369, -inf
    %376 = vmax.xlane.f32.xlu0 %v375
    %v377 = vpop.xlane.xlu0 %376
    %v378 = vsub.f32 %v369, %v377
    %v379 = vmul.f32 %v378, 1.442695
    %v380 = vpow.pop %v379
    %v381 = vsel %vm374, %v380, 0.0
    %382 = vadd.xlane.f32.xlu0 %v381
    %v383 = vpop.xlane.xlu0 %382
    %v384 = vrcp.pop %v383
    %v385 = vmul.f32 %v380, %v384
    %386 = vst.msk [vmem:[#allocation2] sm:$0xff] %vm374, %v385
    // Predicated region
    $region38: #{tpu_custom_call.1} parent=1 // pred_check
      _
    $region39: #{tpu_custom_call.1} parent=1 // pred_check_branch
      %388 = sbr.rel (0) target = $region41
    $region40: #{tpu_custom_call.1} parent=1 // pred_region
      %s390 = ssub.s32 128, 128
      %391 = vsyncadd [#allocation3], %s390
      %s393 = sshll.u32 [#allocation2], 4
      %s394 = int_to_ptr.vmem [resolvable:$true] %s393
      %396 = dma.vmem_to_hbm [thread:$0]  %s394, 128, %s9, [#allocation3]
    $region41: #{tpu_custom_call.1} parent=1 // pred_fallthru
      _
    // Predicated region
    $region42: #{tpu_custom_call.1} parent=1 // pred_check
      _
    $region43: #{tpu_custom_call.1} parent=1 // pred_check_branch
      %398 = sbr.rel (0) target = $region45
    $region44: #{tpu_custom_call.1} parent=1 // pred_region
      %399 = dma.done [#allocation3], 128
    $region45: #{tpu_custom_call.1} parent=1 // pred_fallthru
      _
    %400 = vsyncpa [#allocation3], 1

</llo_original>
